<compile_context>
chip_gen: v6e
topology: v6e:2x2x1
jax: 0.10.0
libtpu: 0.0.40
codegen_flags: <defaults>
</compile_context>

<pallas_src>
import functools

import jax
import jax.numpy as jnp
from jax import lax
from jax.experimental import pallas as pl
from jax.experimental.pallas import tpu as pltpu


# ---------------------------------------------------------------------------
# Kernels
# ---------------------------------------------------------------------------
def _weight_fuse_kernel(wb_ref, wt_ref, m_ref):
    """M = Wb^T @ Wt  (contract inner_dim = axis 0 of both weights)."""
    m_ref[...] = lax.dot_general(
        wb_ref[...], wt_ref[...],
        dimension_numbers=(((0,), (0,)), ((), ())),
        preferred_element_type=jnp.float32,
    ).astype(m_ref.dtype)


def _proj_dot_tile_kernel(z_ref, x_ref, m_ref, out_ref):
    """out_tile = (z_tile @ M) @ x_tile^T, all via dot_general (no explicit .T)."""
    # k = z_tile @ M : (tb, trunk_dim)   -- contract branch_dim
    k = lax.dot_general(
        z_ref[...], m_ref[...],
        dimension_numbers=(((1,), (0,)), ((), ())),
        preferred_element_type=jnp.float32,
    )
    # out = k @ x^T : (tb, tn)           -- contract trunk_dim (last axis of both)
    out = lax.dot_general(
        k.astype(x_ref.dtype), x_ref[...],
        dimension_numbers=(((1,), (1,)), ((), ())),
        preferred_element_type=jnp.float32,
    )
    out_ref[...] = out.astype(out_ref.dtype)


def _proj_dot_fused_kernel(z_ref, x_ref, wb_ref, wt_ref, out_ref):
    """Small-shape fast path: M, k and out in a single kernel (one launch)."""
    m = lax.dot_general(
        wb_ref[...], wt_ref[...],
        dimension_numbers=(((0,), (0,)), ((), ())),
        preferred_element_type=jnp.float32,
    )
    k = lax.dot_general(
        z_ref[...], m.astype(z_ref.dtype),
        dimension_numbers=(((1,), (0,)), ((), ())),
        preferred_element_type=jnp.float32,
    )
    out = lax.dot_general(
        k.astype(x_ref.dtype), x_ref[...],
        dimension_numbers=(((1,), (1,)), ((), ())),
        preferred_element_type=jnp.float32,
    )
    out_ref[...] = out.astype(out_ref.dtype)


# ---------------------------------------------------------------------------
# Wrappers
# ---------------------------------------------------------------------------
def fuse_weights(wb, wt):
    """One-time precompute of M = Wb^T @ Wt (branch_dim, trunk_dim)."""
    inner_dim, branch_dim = wb.shape
    inner_dim2, trunk_dim = wt.shape
    assert inner_dim == inner_dim2
    return pl.pallas_call(
        _weight_fuse_kernel,
        out_shape=jax.ShapeDtypeStruct((branch_dim, trunk_dim), jnp.float32),
    )(wb, wt)


@functools.partial(jax.jit, static_argnames=("tile_b", "tile_n"))
def proj_dot_product(x, z, wt, wb, *, tile_b=512, tile_n=512):
    """Forward pass of ProjDotProduct.  x: (n, trunk), z: (b, branch) -> (b, n)."""
    n, trunk_dim = x.shape
    b, branch_dim = z.shape
    inner_dim = wt.shape[0]
    assert wt.shape == (inner_dim, trunk_dim)
    assert wb.shape == (inner_dim, branch_dim)

    tb = min(tile_b, b)
    tn = min(tile_n, n)
    grid_b = pl.cdiv(b, tb)
    grid_n = pl.cdiv(n, tn)

    # --- Small-shape fast path: one fused kernel, no grid, no pipeline. ---
    if grid_b == 1 and grid_n == 1:
        return pl.pallas_call(
            _proj_dot_fused_kernel,
            out_shape=jax.ShapeDtypeStruct((b, n), x.dtype),
        )(z, x, wb, wt)

    # --- Tiled path: fuse weights once (tiny), then 2-D parallel grid. ---
    m = fuse_weights(wb, wt)

    out_bytes = b * n * jnp.dtype(x.dtype).itemsize
    in_bytes = (z.size * z.dtype.itemsize
                + grid_b * x.size * x.dtype.itemsize
                + m.size * m.dtype.itemsize)
    cost = pl.CostEstimate(
        flops=2 * b * trunk_dim * (n + grid_n * branch_dim),
        transcendentals=0,
        bytes_accessed=int(in_bytes + out_bytes),
    )

    return pl.pallas_call(
        _proj_dot_tile_kernel,
        out_shape=jax.ShapeDtypeStruct((b, n), x.dtype),
        grid_spec=pltpu.PrefetchScalarGridSpec(
            num_scalar_prefetch=0,
            grid=(grid_b, grid_n),
            in_specs=[
                pl.BlockSpec((tb, branch_dim), lambda i, j: (i, 0)),         # z: resident over j
                pl.BlockSpec((tn, trunk_dim), lambda i, j: (j, 0)),          # x tile
                pl.BlockSpec((branch_dim, trunk_dim), lambda i, j: (0, 0)),  # M: fully resident
            ],
            out_specs=pl.BlockSpec((tb, tn), lambda i, j: (i, j)),
        ),
        compiler_params=pltpu.CompilerParams(
            dimension_semantics=("parallel", "parallel"),
        ),
        cost_estimate=cost,
    )(z, x, m)


def init_params(key, branch_dim, trunk_dim, inner_dim):
    """Deterministic orthogonal init with gain = 1/inner_dim (module defaults)."""
    gain = 1.0 / inner_dim
    k1, k2 = jax.random.split(key)
    ortho = jax.nn.initializers.orthogonal(scale=gain)
    wb = ortho(k1, (inner_dim, branch_dim), jnp.float32)  # branch_proj.weight
    wt = ortho(k2, (inner_dim, trunk_dim), jnp.float32)   # trunk_proj.weight
    return wb, wt


def _reference(x, z, wt, wb):
    q = x @ wt.T
    k = z @ wb.T
    return k @ q.T


if __name__ == "__main__":
    key = jax.random.PRNGKey(0)
    kx, kz, kp, kx2, kz2 = jax.random.split(key, 5)

    branch_dim = 16
    trunk_dim = 32
    inner_dim = 32
    wb, wt = init_params(kp, branch_dim, trunk_dim, inner_dim)

    # --- Case 1: small shapes (module-consistent) -> fused no-grid fast path. ---
    b, n = 8, 16
    x = jax.random.normal(kx, (n, trunk_dim), dtype=jnp.float32)
    z = jax.random.normal(kz, (b, branch_dim), dtype=jnp.float32)

    out = jax.block_until_ready(proj_dot_product(x, z, wt, wb))
    ref = _reference(x, z, wt, wb)
    assert out.shape == (b, n)
    assert jnp.allclose(out, ref, atol=1e-5, rtol=1e-4), "mismatch vs reference (small)"

    # --- Case 2: larger + ragged shapes -> tiled parallel grid, no wrapper padding. ---
    b2, n2 = 384, 640
    x2 = jax.random.normal(kx2, (n2, trunk_dim), dtype=jnp.float32)
    z2 = jax.random.normal(kz2, (b2, branch_dim), dtype=jnp.float32)

    out2 = jax.block_until_ready(
        proj_dot_product(x2, z2, wt, wb, tile_b=256, tile_n=256))
    ref2 = _reference(x2, z2, wt, wb)
    assert out2.shape == (b2, n2)
    assert jnp.allclose(out2, ref2, atol=1e-5, rtol=1e-4), "mismatch vs reference (tiled)"

    print("KERNEL_OK")
</pallas_src>

<mosaic_0001>
module attributes {stable_mosaic.version = 11 : i64} {
  func.func @_proj_dot_fused_kernel(%arg0: memref<8x16xf32, #tpu.memory_space<vmem>>, %arg1: memref<16x32xf32, #tpu.memory_space<vmem>>, %arg2: memref<32x16xf32, #tpu.memory_space<vmem>>, %arg3: memref<32x32xf32, #tpu.memory_space<vmem>>, %arg4: memref<8x16xf32, #tpu.memory_space<vmem>>) attributes {dimension_semantics = [], scalar_prefetch = 0 : i64, scratch_operands = 0 : i64, tpu.core_type = #tpu.core_type<tc>} {
    %c0 = arith.constant 0 : index
    %c0_0 = arith.constant 0 : index
    %0 = vector.load %arg2[%c0, %c0_0] : memref<32x16xf32, #tpu.memory_space<vmem>>, vector<32x16xf32>
    %c0_1 = arith.constant 0 : index
    %c0_2 = arith.constant 0 : index
    %1 = vector.load %arg3[%c0_1, %c0_2] : memref<32x32xf32, #tpu.memory_space<vmem>>, vector<32x32xf32>
    %cst = arith.constant dense<0.000000e+00> : vector<16x32xf32>
    %2 = tpu.matmul %0, %1, %cst {dimension_numbers = #tpu.dot_dimension_numbers<[0], [0], [1], [1], [0, 1, 1, 1], [], []>} : vector<32x16xf32>, vector<32x32xf32>, vector<16x32xf32> -> vector<16x32xf32>
    %c0_3 = arith.constant 0 : index
    %c0_4 = arith.constant 0 : index
    %3 = vector.load %arg0[%c0_3, %c0_4] : memref<8x16xf32, #tpu.memory_space<vmem>>, vector<8x16xf32>
    %cst_5 = arith.constant dense<0.000000e+00> : vector<8x32xf32>
    %4 = tpu.matmul %3, %2, %cst_5 {dimension_numbers = #tpu.dot_dimension_numbers<[1], [0], [0], [1], [0, 0, 1, 1], [], []>} : vector<8x16xf32>, vector<16x32xf32>, vector<8x32xf32> -> vector<8x32xf32>
    %c0_6 = arith.constant 0 : index
    %c0_7 = arith.constant 0 : index
    %5 = vector.load %arg1[%c0_6, %c0_7] : memref<16x32xf32, #tpu.memory_space<vmem>>, vector<16x32xf32>
    %cst_8 = arith.constant dense<0.000000e+00> : vector<8x16xf32>
    %6 = tpu.matmul %4, %5, %cst_8 {dimension_numbers = #tpu.dot_dimension_numbers<[1], [1], [0], [0], [0, 0, 1, 0], [], []>} : vector<8x32xf32>, vector<16x32xf32>, vector<8x16xf32> -> vector<8x16xf32>
    %c0_9 = arith.constant 0 : index
    %c0_10 = arith.constant 0 : index
    %7 = vector.load %arg4[%c0_9, %c0_10] : memref<8x16xf32, #tpu.memory_space<vmem>>, vector<8x16xf32>
    tpu.vector_store %arg4[%c0_9, %c0_10], %6 {strides = array<i32>} : memref<8x16xf32, #tpu.memory_space<vmem>>, vector<8x16xf32>,
    return
  }
}

</mosaic_0001>

<llo_original>
// kernel: proj_dot_product.1
$region0: #{proj_dot_product.1}
  #allocation0 [shape = 'u32[]', space=smem, size = 0x4, offset = 0x4, fixed_abs, tag = 'smem constant byte address 0x4 - core index']
  #allocation1 [shape = 'u32[144,128]{1,0:T(1,128)}', space=vmem, size = 0x12000, scoped, tag = 'internal scratch']
  %s0 = inlined_call_operand.hbm [shape: f32[8,16], index: 0, kind: input, shape index: {}]
  %s1 = inlined_call_operand.vmem [shape: f32[16,32], index: 1, kind: input, shape index: {}]
  %s2 = inlined_call_operand.vmem [shape: f32[32,16], index: 2, kind: input, shape index: {}]
  %s3 = inlined_call_operand.vmem [shape: f32[32,32], index: 3, kind: input, shape index: {}]
  %s4 = inlined_call_operand.hbm [shape: f32[8,16], index: 4, kind: output, shape index: {}]
  %s5 = sld [smem:[#allocation0]]
  $region30: #{proj_dot_product.1} parent=0
    _
  %s7 = ssub.s32 1, %s5
  %s8 = scalar_select 0, %s7, %s5
  $region1: #{proj_dot_product.1} parent=0
    #allocation2 [shape = 'u8[4096]{0}', space=vmem, size = 0x1000, scoped, tag = 'input window, operand 0, single buffered']
    #allocation3 [shape = 's32[1]{0}', space=sflag, size = 0x4, scoped, tag = 'scoped memory for proj_dot_product.1']
    #allocation4 [shape = 's32[1]{0}', space=sflag, size = 0x4, scoped, tag = 'scoped memory for proj_dot_product.1']
    #allocation5 [shape = 'u8[4096]{0}', space=vmem, size = 0x1000, scoped, tag = 'output window, operand 0, single buffered']
    %9 = vsyncpa [#allocation3], 0
    %10 = vsyncpa [#allocation4], 0
    // Predicated region
    $region2: #{proj_dot_product.1} parent=1 // pred_check
      _
    $region3: #{proj_dot_product.1} parent=1 // pred_check_branch
      %12 = sbr.rel (0) target = $region5
    $region4: #{proj_dot_product.1} parent=1 // pred_region
      %s14 = ssub.s32 128, 128
      %15 = vsyncadd [#allocation3], %s14
      %s17 = sshll.u32 [#allocation2], 4
      %s18 = int_to_ptr.vmem [resolvable:$true] %s17
      %20 = dma.hbm_to_vmem [thread:$0]  %s0, 128, %s18, [#allocation3]
    $region5: #{proj_dot_product.1} parent=1 // pred_fallthru
      _
    // Predicated region
    $region6: #{proj_dot_product.1} parent=1 // pred_check
      _
    $region7: #{proj_dot_product.1} parent=1 // pred_check_branch
      %22 = sbr.rel (0) target = $region9
    $region8: #{proj_dot_product.1} parent=1 // pred_region
      _
    $region9: #{proj_dot_product.1} parent=1 // pred_fallthru
      _
    // Predicated region
    $region10: #{proj_dot_product.1} parent=1 // pred_check
      _
    $region11: #{proj_dot_product.1} parent=1 // pred_check_branch
      %24 = sbr.rel (0) target = $region13
    $region12: #{proj_dot_product.1} parent=1 // pred_region
      _
    $region13: #{proj_dot_product.1} parent=1 // pred_fallthru
      _
    // Predicated region
    $region14: #{proj_dot_product.1} parent=1 // pred_check
      _
    $region15: #{proj_dot_product.1} parent=1 // pred_check_branch
      %26 = sbr.rel (0) target = $region17
    $region16: #{proj_dot_product.1} parent=1 // pred_region
      _
    $region17: #{proj_dot_product.1} parent=1 // pred_fallthru
      _
    // Predicated region
    $region18: #{proj_dot_product.1} parent=1 // pred_check
      _
    $region19: #{proj_dot_product.1} parent=1 // pred_check_branch
      %28 = sbr.rel (0) target = $region21
    $region20: #{proj_dot_product.1} parent=1 // pred_region
      %29 = dma.done [#allocation3], 128
    $region21: #{proj_dot_product.1} parent=1 // pred_fallthru
      _
    %v30 = vld [vmem:[%s2] sm:$0xff]
    %v31 = vld [vmem:[%s2 + $0x8] sm:$0xff]
    %v32 = vld [vmem:[%s2 + $0x10] sm:$0xff]
    %v33 = vld [vmem:[%s2 + $0x18] sm:$0xff]
    %v34 = vld [vmem:[%s3] sm:$0xff]
    %v35 = vld [vmem:[%s3 + $0x8] sm:$0xff]
    %v36 = vld [vmem:[%s3 + $0x10] sm:$0xff]
    %v37 = vld [vmem:[%s3 + $0x18] sm:$0xff]
    %38 = vxpose.xlu0.b32.start [1/16] %v30, 128
    %39 = vxpose.xlu0.b32.cont [2/16] %v31, 128
    %40 = vxpose.xlu0.b32.cont [3/16] %v32, 128
    %41 = vxpose.xlu0.b32.cont [4/16] %v33, 128
    %42 = vxpose.xlu0.b32.cont [5/16] 0.0, 128
    %43 = vxpose.xlu0.b32.cont [6/16] 0.0, 128
    %44 = vxpose.xlu0.b32.cont [7/16] 0.0, 128
    %45 = vxpose.xlu0.b32.cont [8/16] 0.0, 128
    %46 = vxpose.xlu0.b32.cont [9/16] 0.0, 128
    %47 = vxpose.xlu0.b32.cont [10/16] 0.0, 128
    %48 = vxpose.xlu0.b32.cont [11/16] 0.0, 128
    %49 = vxpose.xlu0.b32.cont [12/16] 0.0, 128
    %50 = vxpose.xlu0.b32.cont [13/16] 0.0, 128
    %51 = vxpose.xlu0.b32.cont [14/16] 0.0, 128
    %52 = vxpose.xlu0.b32.cont [15/16] 0.0, 128
    %53 = vxpose.xlu0.b32.end [16/16] 0.0, 128
    %v54 = vpop.trf.xlu0
    %v55 = vpop.trf.xlu0
    %v56 = vpop.trf.xlu0
    %v57 = vpop.trf.xlu0
    %v58 = vpop.trf.xlu0
    %v59 = vpop.trf.xlu0
    %v60 = vpop.trf.xlu0
    %v61 = vpop.trf.xlu0
    %v62 = vpop.trf.xlu0
    %v63 = vpop.trf.xlu0
    %v64 = vpop.trf.xlu0
    %v65 = vpop.trf.xlu0
    %v66 = vpop.trf.xlu0
    %v67 = vpop.trf.xlu0
    %v68 = vpop.trf.xlu0
    %v69 = vpop.trf.xlu0
    %vm70 = vcmask 261120
    %v72 = vsel %vm70, %v54, 0
    %v75 = vsel %vm70, %v55, 0
    %77 = vmatprep.subr.mxu0 0.0
    %78 = vmatpush1.msra.mxu0 0.0
    %79 = vmatprep.subr.mxu0 0.0
    %80 = vmatpush1.msra.mxu0 0.0
    %81 = vmatprep.subr.mxu0 0.0
    %82 = vmatpush1.msra.mxu0 0.0
    %83 = vmatprep.subr.mxu0 0.0
    %84 = vmatpush1.msra.mxu0 0.0
    %85 = vmatprep.subr.mxu0 0.0
    %86 = vmatpush1.msra.mxu0 0.0
    %87 = vmatprep.subr.mxu0 0.0
    %88 = vmatpush1.msra.mxu0 0.0
    %89 = vmatprep.subr.mxu0 0.0
    %90 = vmatpush1.msra.mxu0 0.0
    %91 = vmatprep.subr.mxu0 0.0
    %92 = vmatpush1.msra.mxu0 0.0
    %93 = vmatprep.subr.mxu0 0.0
    %94 = vmatpush1.msra.mxu0 0.0
    %95 = vmatprep.subr.mxu0 0.0
    %96 = vmatpush1.msra.mxu0 0.0
    %97 = vmatprep.subr.mxu0 0.0
    %98 = vmatpush1.msra.mxu0 0.0
    %99 = vmatprep.subr.mxu0 0.0
    %100 = vmatpush1.msra.mxu0 0.0
    %101 = vmatprep.subr.mxu0 0.0
    %102 = vmatpush1.msra.mxu0 %v37
    %103 = vmatprep.subr.mxu0 0.0
    %104 = vmatpush1.msra.mxu0 %v36
    %105 = vmatprep.subr.mxu0 0.0
    %106 = vmatpush1.msra.mxu0 %v35
    %107 = vmatprep.subr.mxu0 0.0
    %108 = vmatpush1.msra.mxu0 %v34
    %109 = vmatprep.subr.mxu0 0.0
    %110 = vmatpush2.msra.mxu0 0.0
    %111 = vmatprep.subr.mxu0 0.0
    %112 = vmatpush2.msra.mxu0 0.0
    %113 = vmatprep.subr.mxu0 0.0
    %114 = vmatpush2.msra.mxu0 0.0
    %115 = vmatprep.subr.mxu0 0.0
    %116 = vmatpush2.msra.mxu0 0.0
    %117 = vmatprep.subr.mxu0 0.0
    %118 = vmatpush2.msra.mxu0 0.0
    %119 = vmatprep.subr.mxu0 0.0
    %120 = vmatpush2.msra.mxu0 0.0
    %121 = vmatprep.subr.mxu0 0.0
    %122 = vmatpush2.msra.mxu0 0.0
    %123 = vmatprep.subr.mxu0 0.0
    %124 = vmatpush2.msra.mxu0 0.0
    %125 = vmatprep.subr.mxu0 0.0
    %126 = vmatpush2.msra.mxu0 0.0
    %127 = vmatprep.subr.mxu0 0.0
    %128 = vmatpush2.msra.mxu0 0.0
    %129 = vmatprep.subr.mxu0 0.0
    %130 = vmatpush2.msra.mxu0 0.0
    %131 = vmatprep.subr.mxu0 0.0
    %132 = vmatpush2.msra.mxu0 0.0
    %133 = vmatprep.subr.mxu0 0.0
    %134 = vmatpush2.msra.mxu0 0.0
    %135 = vmatprep.subr.mxu0 0.0
    %136 = vmatpush2.msra.mxu0 0.0
    %137 = vmatprep.subr.mxu0 0.0
    %138 = vmatpush2.msra.mxu0 0.0
    %139 = vmatprep.subr.mxu0 0.0
    %140 = vmatpush2.msra.mxu0 0.0
    %141 = vmatprep.mubr.f32.mxu0 0.0
    %142 = vmatmul.mubr.f32.gmra.mxu0 %v72
    %v143 = vpop.f32.mrf.mxu0
    %v144 = vadd.f32 0.0, %v143
    %v145 = vpop.f32.mrf.mxu0
    %146 = vmatprep.mubr.f32.mxu0 0.0
    %147 = vmatmul.mubr.f32.gmra.mxu0 %v75
    %v148 = vpop.f32.mrf.mxu0
    %v149 = vadd.f32 0.0, %v148
    %v150 = vpop.f32.mrf.mxu0
    %151 = vdwg.mxu0
    %v152 = vld [vmem:[#allocation2] sm:$0xff]
    %vm153 = vcmask 130048
    %v155 = vsel %vm153, %v152, 0
    %157 = vmatprep.subr.mxu0 0.0
    %158 = vmatpush1.msra.mxu0 0.0
    %159 = vmatprep.subr.mxu0 0.0
    %160 = vmatpush1.msra.mxu0 0.0
    %161 = vmatprep.subr.mxu0 0.0
    %162 = vmatpush1.msra.mxu0 0.0
    %163 = vmatprep.subr.mxu0 0.0
    %164 = vmatpush1.msra.mxu0 0.0
    %165 = vmatprep.subr.mxu0 0.0
    %166 = vmatpush1.msra.mxu0 0.0
    %167 = vmatprep.subr.mxu0 0.0
    %168 = vmatpush1.msra.mxu0 0.0
    %169 = vmatprep.subr.mxu0 0.0
    %170 = vmatpush1.msra.mxu0 0.0
    %171 = vmatprep.subr.mxu0 0.0
    %172 = vmatpush1.msra.mxu0 0.0
    %173 = vmatprep.subr.mxu0 0.0
    %174 = vmatpush1.msra.mxu0 0.0
    %175 = vmatprep.subr.mxu0 0.0
    %176 = vmatpush1.msra.mxu0 0.0
    %177 = vmatprep.subr.mxu0 0.0
    %178 = vmatpush1.msra.mxu0 0.0
    %179 = vmatprep.subr.mxu0 0.0
    %180 = vmatpush1.msra.mxu0 0.0
    %181 = vmatprep.subr.mxu0 0.0
    %182 = vmatpush1.msra.mxu0 0.0
    %183 = vmatprep.subr.mxu0 0.0
    %184 = vmatpush1.msra.mxu0 0.0
    %185 = vmatprep.subr.mxu0 0.0
    %186 = vmatpush1.msra.mxu0 %v149
    %187 = vmatprep.subr.mxu0 0.0
    %188 = vmatpush1.msra.mxu0 %v144
    %189 = vmatprep.subr.mxu0 0.0
    %190 = vmatpush2.msra.mxu0 0.0
    %191 = vmatprep.subr.mxu0 0.0
    %192 = vmatpush2.msra.mxu0 0.0
    %193 = vmatprep.subr.mxu0 0.0
    %194 = vmatpush2.msra.mxu0 0.0
    %195 = vmatprep.subr.mxu0 0.0
    %196 = vmatpush2.msra.mxu0 0.0
    %197 = vmatprep.subr.mxu0 0.0
    %198 = vmatpush2.msra.mxu0 0.0
    %199 = vmatprep.subr.mxu0 0.0
    %200 = vmatpush2.msra.mxu0 0.0
    %201 = vmatprep.subr.mxu0 0.0
    %202 = vmatpush2.msra.mxu0 0.0
    %203 = vmatprep.subr.mxu0 0.0
    %204 = vmatpush2.msra.mxu0 0.0
    %205 = vmatprep.subr.mxu0 0.0
    %206 = vmatpush2.msra.mxu0 0.0
    %207 = vmatprep.subr.mxu0 0.0
    %208 = vmatpush2.msra.mxu0 0.0
    %209 = vmatprep.subr.mxu0 0.0
    %210 = vmatpush2.msra.mxu0 0.0
    %211 = vmatprep.subr.mxu0 0.0
    %212 = vmatpush2.msra.mxu0 0.0
    %213 = vmatprep.subr.mxu0 0.0
    %214 = vmatpush2.msra.mxu0 0.0
    %215 = vmatprep.subr.mxu0 0.0
    %216 = vmatpush2.msra.mxu0 0.0
    %217 = vmatprep.subr.mxu0 0.0
    %218 = vmatpush2.msra.mxu0 0.0
    %219 = vmatprep.subr.mxu0 0.0
    %220 = vmatpush2.msra.mxu0 0.0
    %221 = vmatprep.mubr.f32.mxu0 0.0
    %222 = vmatmul.mubr.f32.gmra.mxu0 %v155
    %v223 = vpop.f32.mrf.mxu0
    %v224 = vadd.f32 0.0, %v223
    %v225 = vpop.f32.mrf.mxu0
    %226 = vdwg.mxu0
    %v227 = vld [vmem:[%s1] sm:$0xff]
    %v228 = vld [vmem:[%s1 + $0x8] sm:$0xff]
    %v230 = vsel %vm70, %v224, 0
    %v233 = vsel %vm70, %v227, 0
    %v236 = vsel %vm70, %v228, 0
    %238 = vmatprep.subr.mxu0 0.0
    %239 = vmatpush1.xpose.msra.mxu0 0.0
    %240 = vmatprep.subr.mxu0 0.0
    %241 = vmatpush1.xpose.msra.mxu0 0.0
    %242 = vmatprep.subr.mxu0 0.0
    %243 = vmatpush1.xpose.msra.mxu0 0.0
    %244 = vmatprep.subr.mxu0 0.0
    %245 = vmatpush1.xpose.msra.mxu0 0.0
    %246 = vmatprep.subr.mxu0 0.0
    %247 = vmatpush1.xpose.msra.mxu0 0.0
    %248 = vmatprep.subr.mxu0 0.0
    %249 = vmatpush1.xpose.msra.mxu0 0.0
    %250 = vmatprep.subr.mxu0 0.0
    %251 = vmatpush1.xpose.msra.mxu0 0.0
    %252 = vmatprep.subr.mxu0 0.0
    %253 = vmatpush1.xpose.msra.mxu0 0.0
    %254 = vmatprep.subr.mxu0 0.0
    %255 = vmatpush1.xpose.msra.mxu0 0.0
    %256 = vmatprep.subr.mxu0 0.0
    %257 = vmatpush1.xpose.msra.mxu0 0.0
    %258 = vmatprep.subr.mxu0 0.0
    %259 = vmatpush1.xpose.msra.mxu0 0.0
    %260 = vmatprep.subr.mxu0 0.0
    %261 = vmatpush1.xpose.msra.mxu0 0.0
    %262 = vmatprep.subr.mxu0 0.0
    %263 = vmatpush1.xpose.msra.mxu0 0.0
    %264 = vmatprep.subr.mxu0 0.0
    %265 = vmatpush1.xpose.msra.mxu0 0.0
    %266 = vmatprep.subr.mxu0 0.0
    %267 = vmatpush1.xpose.msra.mxu0 %v236
    %268 = vmatprep.subr.mxu0 0.0
    %269 = vmatpush1.xpose.msra.mxu0 %v233
    %270 = vmatprep.subr.mxu0 0.0
    %271 = vmatpush2.xpose.msra.mxu0 0.0
    %272 = vmatprep.subr.mxu0 0.0
    %273 = vmatpush2.xpose.msra.mxu0 0.0
    %274 = vmatprep.subr.mxu0 0.0
    %275 = vmatpush2.xpose.msra.mxu0 0.0
    %276 = vmatprep.subr.mxu0 0.0
    %277 = vmatpush2.xpose.msra.mxu0 0.0
    %278 = vmatprep.subr.mxu0 0.0
    %279 = vmatpush2.xpose.msra.mxu0 0.0
    %280 = vmatprep.subr.mxu0 0.0
    %281 = vmatpush2.xpose.msra.mxu0 0.0
    %282 = vmatprep.subr.mxu0 0.0
    %283 = vmatpush2.xpose.msra.mxu0 0.0
    %284 = vmatprep.subr.mxu0 0.0
    %285 = vmatpush2.xpose.msra.mxu0 0.0
    %286 = vmatprep.subr.mxu0 0.0
    %287 = vmatpush2.xpose.msra.mxu0 0.0
    %288 = vmatprep.subr.mxu0 0.0
    %289 = vmatpush2.xpose.msra.mxu0 0.0
    %290 = vmatprep.subr.mxu0 0.0
    %291 = vmatpush2.xpose.msra.mxu0 0.0
    %292 = vmatprep.subr.mxu0 0.0
    %293 = vmatpush2.xpose.msra.mxu0 0.0
    %294 = vmatprep.subr.mxu0 0.0
    %295 = vmatpush2.xpose.msra.mxu0 0.0
    %296 = vmatprep.subr.mxu0 0.0
    %297 = vmatpush2.xpose.msra.mxu0 0.0
    %298 = vmatprep.subr.mxu0 0.0
    %299 = vmatpush2.xpose.msra.mxu0 0.0
    %300 = vmatprep.subr.mxu0 0.0
    %301 = vmatpush2.xpose.msra.mxu0 0.0
    %302 = vmatprep.mubr.f32.mxu0 0.0
    %303 = vmatmul.mubr.f32.gmra.mxu0 %v230
    %v304 = vpop.f32.mrf.mxu0
    %v305 = vadd.f32 0.0, %v304
    %v306 = vpop.f32.mrf.mxu0
    %307 = vdwg.mxu0
    %308 = vst.msk [vmem:[#allocation5] sm:$0xff] %vm153, %v305
    // Predicated region
    $region22: #{proj_dot_product.1} parent=1 // pred_check
      _
    $region23: #{proj_dot_product.1} parent=1 // pred_check_branch
      %310 = sbr.rel (0) target = $region25
    $region24: #{proj_dot_product.1} parent=1 // pred_region
      %s312 = ssub.s32 128, 128
      %313 = vsyncadd [#allocation4], %s312
      %s315 = sshll.u32 [#allocation5], 4
      %s316 = int_to_ptr.vmem [resolvable:$true] %s315
      %318 = dma.vmem_to_hbm [thread:$0]  %s316, 128, %s4, [#allocation4]
    $region25: #{proj_dot_product.1} parent=1 // pred_fallthru
      _
    // Predicated region
    $region26: #{proj_dot_product.1} parent=1 // pred_check
      _
    $region27: #{proj_dot_product.1} parent=1 // pred_check_branch
      %320 = sbr.rel (0) target = $region29
    $region28: #{proj_dot_product.1} parent=1 // pred_region
      %321 = dma.done [#allocation4], 128
    $region29: #{proj_dot_product.1} parent=1 // pred_fallthru
      _
    %322 = vsyncpa [#allocation3], 1
    %323 = vsyncpa [#allocation4], 1

</llo_original>
